<compile_context>
chip_gen: v5e
topology: v5e:2x2
jax: 0.10.0
libtpu: 0.0.40
codegen_flags: <defaults>
</compile_context>

<pallas_src>
import functools

import jax
import jax.numpy as jnp
from jax.experimental import pallas as pl
from jax.experimental.pallas import tpu as pltpu

EPS = 1e-6
DROPOUT_P = 0.1


def _splitmix32(h):
    """Cheap stateless hash on uint32 (per-element dropout randomness)."""
    h = (h ^ (h >> 16)) * jnp.uint32(0x7FEB352D)
    h = (h ^ (h >> 15)) * jnp.uint32(0x846CA68B)
    h = h ^ (h >> 16)
    return h


def _sublayer_connection_kernel(seed_ref,                       # scalar prefetch (SMEM)
                                xf_ref, xr_ref, gamma_ref, beta_ref, w_ref, b_ref,
                                o_ref,
                                *, d_full, dropout_p, training):
    x = xf_ref[...].astype(jnp.float32)                         # (TR, D): full feature dim

    # ---- LayerNorm (unbiased std, eps added to std: annotated-transformer variant) ----
    mean = jnp.mean(x, axis=-1, keepdims=True)
    diff = x - mean
    var_unbiased = jnp.sum(diff * diff, axis=-1, keepdims=True) / jnp.float32(d_full - 1)
    inv = 1.0 / (jnp.sqrt(var_unbiased) + EPS)
    normed = gamma_ref[...] * (diff * inv) + beta_ref[...]

    # ---- sublayer: Linear(D, D), one output-column tile -> MXU in bf16 ----
    y = jnp.dot(normed.astype(jnp.bfloat16), w_ref[...],
                preferred_element_type=jnp.float32) + b_ref[...]

    # ---- dropout (inverted scale) via tiling-independent counter hash ----
    if training and dropout_p > 0.0:
        tr, tc = o_ref.shape
        row0 = (pl.program_id(0) * tr).astype(jnp.uint32)
        col0 = (pl.program_id(1) * tc).astype(jnp.uint32)
        r = jax.lax.broadcasted_iota(jnp.int32, (tr, tc), 0).astype(jnp.uint32) + row0
        c = jax.lax.broadcasted_iota(jnp.int32, (tr, tc), 1).astype(jnp.uint32) + col0
        idx = r * jnp.uint32(d_full) + c                        # global element index
        h = _splitmix32(idx ^ (seed_ref[0].astype(jnp.uint32) * jnp.uint32(0x9E3779B9)))
        h24 = (h >> 8).astype(jnp.int32)                        # top 24 bits, non-negative
        keep = h24 >= jnp.int32(int(round(dropout_p * (1 << 24))))
        y = jnp.where(keep, y * jnp.float32(1.0 / (1.0 - dropout_p)), jnp.float32(0.0))

    # ---- residual connection (matching column tile of x) ----
    o_ref[...] = (xr_ref[...].astype(jnp.float32) + y).astype(o_ref.dtype)


def _pick_row_tile(rows, desired):
    t = max(1, min(desired, rows))
    while rows % t != 0:
        t -= 1
    return t


def _pick_col_tile(d, desired):
    if d <= desired:
        return d
    start = desired - (desired % 128)
    for t in range(start, 127, -128):                 # prefer lane-dense multiples of 128
        if d % t == 0:
            return t
    return d                                          # fall back: no column tiling


def sublayer_connection(x, gamma, beta, w, b, *, seed=0,
                        dropout_p=DROPOUT_P, training=True,
                        row_tile=256, col_tile=512):
    """x: (B, S, D). gamma/beta/b: (D,). w: (D, D) (Linear sublayer: y = x @ w + b)."""
    B, S, D = x.shape
    rows = B * S

    tr = _pick_row_tile(rows, row_tile)
    tc = _pick_col_tile(D, col_tile)

    x2 = x.reshape(rows, D)
    gamma2 = gamma.reshape(1, D).astype(jnp.float32)
    beta2 = beta.reshape(1, D).astype(jnp.float32)
    b2 = b.reshape(1, D).astype(jnp.float32)
    w_bf16 = w.astype(jnp.bfloat16)                   # MXU-native; halves weight DMA/VMEM
    seed_arr = jnp.array([seed], dtype=jnp.int32)

    kernel = functools.partial(_sublayer_connection_kernel,
                               d_full=D, dropout_p=dropout_p, training=training)

    out = pl.pallas_call(
        kernel,
        out_shape=jax.ShapeDtypeStruct((rows, D), x.dtype),
        grid_spec=pltpu.PrefetchScalarGridSpec(
            num_scalar_prefetch=1,
            grid=(rows // tr, D // tc),               # column axis innermost: x row block stays put
            in_specs=[
                pl.BlockSpec((tr, D),  lambda i, j, s: (i, 0)),   # x, full row (LayerNorm)
                pl.BlockSpec((tr, tc), lambda i, j, s: (i, j)),   # x, column tile (residual)
                pl.BlockSpec((1, D),   lambda i, j, s: (0, 0)),   # gamma
                pl.BlockSpec((1, D),   lambda i, j, s: (0, 0)),   # beta
                pl.BlockSpec((D, tc),  lambda i, j, s: (0, j)),   # weight column tile (bf16)
                pl.BlockSpec((1, tc),  lambda i, j, s: (0, j)),   # bias column tile
            ],
            out_specs=pl.BlockSpec((tr, tc), lambda i, j, s: (i, j)),
        ),
        compiler_params=pltpu.CompilerParams(
            dimension_semantics=("parallel", "parallel"),
            vmem_limit_bytes=48 * 1024 * 1024),
    )(seed_arr, x2, x2, gamma2, beta2, w_bf16, b2)

    return out.reshape(B, S, D)


if __name__ == "__main__":
    B, S, D = 2, 8, 32   # batch=2, seq=8, hidden(size)=32

    key = jax.random.PRNGKey(0)
    kx, kw = jax.random.split(key)

    x = jax.random.normal(kx, (B, S, D), dtype=jnp.float32)

    # LayerNorm params (as in __init__: ones / zeros)
    gamma = jnp.ones((D,), dtype=jnp.float32)
    beta = jnp.zeros((D,), dtype=jnp.float32)

    # deterministic Linear(size, size) sublayer parameters
    # TODO(synk): the PyTorch module accepts an arbitrary `sublayer` callable;
    # it is bound here to a Linear(size, size) so it can live inside the kernel.
    w = 0.02 * jax.random.normal(kw, (D, D), dtype=jnp.float32)
    b = jnp.zeros((D,), dtype=jnp.float32)

    out = sublayer_connection(x, gamma, beta, w, b,
                              seed=0, dropout_p=DROPOUT_P, training=True)
    jax.block_until_ready(out)
    assert out.shape == (B, S, D) and out.dtype == x.dtype
    assert bool(jnp.all(jnp.isfinite(out)))
    print("KERNEL_OK")
</pallas_src>

<mosaic_0001>
module attributes {stable_mosaic.version = 11 : i64} {
  func.func @_sublayer_connection_kernel(%arg0: i32, %arg1: i32, %arg2: memref<1xi32, #tpu.memory_space<smem>>, %arg3: memref<16x32xf32, #tpu.memory_space<vmem>>, %arg4: memref<16x32xf32, #tpu.memory_space<vmem>>, %arg5: memref<1x32xf32, #tpu.memory_space<vmem>>, %arg6: memref<1x32xf32, #tpu.memory_space<vmem>>, %arg7: memref<32x32xbf16, #tpu.memory_space<vmem>>, %arg8: memref<1x32xf32, #tpu.memory_space<vmem>>, %arg9: memref<16x32xf32, #tpu.memory_space<vmem>>) attributes {dimension_semantics = [#tpu.dimension_semantics<parallel>, #tpu.dimension_semantics<parallel>], iteration_bounds = array<i64: 1, 1>, scalar_prefetch = 1 : i64, scratch_operands = 0 : i64, tpu.core_type = #tpu.core_type<tc>, window_params = [{transform_indices = @transform_0, window_bounds = array<i64: 16, 32>}, {transform_indices = @transform_1, window_bounds = array<i64: 16, 32>}, {pipeline_mode = #tpu.pipeline_mode<synchronous>, transform_indices = @transform_2, window_bounds = array<i64: 1, 32>}, {pipeline_mode = #tpu.pipeline_mode<synchronous>, transform_indices = @transform_3, window_bounds = array<i64: 1, 32>}, {transform_indices = @transform_4, window_bounds = array<i64: 32, 32>}, {transform_indices = @transform_5, window_bounds = array<i64: 1, 32>}, {transform_indices = @transform_6, window_bounds = array<i64: 16, 32>}]} {
    %c0 = arith.constant 0 : index
    %c0_0 = arith.constant 0 : index
    %0 = vector.load %arg3[%c0, %c0_0] : memref<16x32xf32, #tpu.memory_space<vmem>>, vector<16x32xf32>
    %cst = arith.constant dense<0.000000e+00> : vector<16xf32>
    %1 = vector.multi_reduction <add>, %0, %cst [1] : vector<16x32xf32> to vector<16xf32>
    %2 = vector.shape_cast %1 : vector<16xf32> to vector<16x1xf32>
    %cst_1 = arith.constant 3.200000e+01 : f32
    %3 = vector.broadcast %cst_1 : f32 to vector<16x1xf32>
    %4 = arith.divf %2, %3 : vector<16x1xf32>
    %5 = vector.broadcast %4 : vector<16x1xf32> to vector<16x32xf32>
    %6 = arith.subf %0, %5 : vector<16x32xf32>
    %7 = arith.mulf %6, %6 : vector<16x32xf32>
    %cst_2 = arith.constant dense<0.000000e+00> : vector<16xf32>
    %8 = vector.multi_reduction <add>, %7, %cst_2 [1] : vector<16x32xf32> to vector<16xf32>
    %9 = vector.shape_cast %8 : vector<16xf32> to vector<16x1xf32>
    %cst_3 = arith.constant 3.100000e+01 : f32
    %10 = vector.broadcast %cst_3 : f32 to vector<16x1xf32>
    %11 = arith.divf %9, %10 : vector<16x1xf32>
    %12 = math.sqrt %11 : vector<16x1xf32>
    %cst_4 = arith.constant 9.99999997E-7 : f32
    %13 = vector.broadcast %cst_4 : f32 to vector<16x1xf32>
    %14 = arith.addf %12, %13 : vector<16x1xf32>
    %cst_5 = arith.constant 1.000000e+00 : f32
    %15 = vector.broadcast %cst_5 : f32 to vector<16x1xf32>
    %16 = arith.divf %15, %14 : vector<16x1xf32>
    %c0_6 = arith.constant 0 : index
    %c0_7 = arith.constant 0 : index
    %17 = vector.load %arg5[%c0_6, %c0_7] : memref<1x32xf32, #tpu.memory_space<vmem>>, vector<1x32xf32>
    %18 = vector.broadcast %16 : vector<16x1xf32> to vector<16x32xf32>
    %19 = arith.mulf %6, %18 : vector<16x32xf32>
    %20 = vector.broadcast %17 : vector<1x32xf32> to vector<16x32xf32>
    %21 = arith.mulf %20, %19 : vector<16x32xf32>
    %c0_8 = arith.constant 0 : index
    %c0_9 = arith.constant 0 : index
    %22 = vector.load %arg6[%c0_8, %c0_9] : memref<1x32xf32, #tpu.memory_space<vmem>>, vector<1x32xf32>
    %23 = vector.broadcast %22 : vector<1x32xf32> to vector<16x32xf32>
    %24 = arith.addf %21, %23 : vector<16x32xf32>
    %25 = arith.truncf %24 : vector<16x32xf32> to vector<16x32xbf16>
    %c0_10 = arith.constant 0 : index
    %c0_11 = arith.constant 0 : index
    %26 = vector.load %arg7[%c0_10, %c0_11] : memref<32x32xbf16, #tpu.memory_space<vmem>>, vector<32x32xbf16>
    %cst_12 = arith.constant dense<0.000000e+00> : vector<16x32xf32>
    %27 = tpu.matmul %25, %26, %cst_12 {dimension_numbers = #tpu.dot_dimension_numbers<[1], [0], [0], [1], [0, 0, 1, 1], [], []>} : vector<16x32xbf16>, vector<32x32xbf16>, vector<16x32xf32> -> vector<16x32xf32>
    %c0_13 = arith.constant 0 : index
    %c0_14 = arith.constant 0 : index
    %28 = vector.load %arg8[%c0_13, %c0_14] : memref<1x32xf32, #tpu.memory_space<vmem>>, vector<1x32xf32>
    %29 = vector.broadcast %28 : vector<1x32xf32> to vector<16x32xf32>
    %30 = arith.addf %27, %29 : vector<16x32xf32>
    %c16_i32 = arith.constant 16 : i32
    %31 = arith.muli %arg0, %c16_i32 : i32
    %c32_i32 = arith.constant 32 : i32
    %32 = arith.muli %arg1, %c32_i32 : i32
    %33 = tpu.iota {dimensions = array<i32: 0>} : vector<16x32xi32>
    %34 = vector.broadcast %31 : i32 to vector<16x32xi32>
    %35 = arith.addi %33, %34 : vector<16x32xi32>
    %36 = tpu.iota {dimensions = array<i32: 1>} : vector<16x32xi32>
    %37 = vector.broadcast %32 : i32 to vector<16x32xi32>
    %38 = arith.addi %36, %37 : vector<16x32xi32>
    %c32_i32_15 = arith.constant 32 : i32
    %39 = vector.broadcast %c32_i32_15 : i32 to vector<16x32xi32>
    %40 = arith.muli %35, %39 : vector<16x32xi32>
    %41 = arith.addi %40, %38 : vector<16x32xi32>
    %c0_16 = arith.constant 0 : index
    %42 = memref.load %arg2[%c0_16] : memref<1xi32, #tpu.memory_space<smem>>
    %c-1640531527_i32 = arith.constant -1640531527 : i32
    %43 = arith.muli %42, %c-1640531527_i32 : i32
    %44 = vector.broadcast %43 : i32 to vector<16x32xi32>
    %45 = arith.xori %41, %44 : vector<16x32xi32>
    %c16_i32_17 = arith.constant 16 : i32
    %46 = vector.broadcast %c16_i32_17 : i32 to vector<16x32xi32>
    %47 = arith.shrui %45, %46 : vector<16x32xi32>
    %48 = arith.xori %45, %47 : vector<16x32xi32>
    %c2146121005_i32 = arith.constant 2146121005 : i32
    %49 = vector.broadcast %c2146121005_i32 : i32 to vector<16x32xi32>
    %50 = arith.muli %48, %49 : vector<16x32xi32>
    %c15_i32 = arith.constant 15 : i32
    %51 = vector.broadcast %c15_i32 : i32 to vector<16x32xi32>
    %52 = arith.shrui %50, %51 : vector<16x32xi32>
    %53 = arith.xori %50, %52 : vector<16x32xi32>
    %c-2073254261_i32 = arith.constant -2073254261 : i32
    %54 = vector.broadcast %c-2073254261_i32 : i32 to vector<16x32xi32>
    %55 = arith.muli %53, %54 : vector<16x32xi32>
    %c16_i32_18 = arith.constant 16 : i32
    %56 = vector.broadcast %c16_i32_18 : i32 to vector<16x32xi32>
    %57 = arith.shrui %55, %56 : vector<16x32xi32>
    %58 = arith.xori %55, %57 : vector<16x32xi32>
    %c8_i32 = arith.constant 8 : i32
    %59 = vector.broadcast %c8_i32 : i32 to vector<16x32xi32>
    %60 = arith.shrui %58, %59 : vector<16x32xi32>
    %c1677722_i32 = arith.constant 1677722 : i32
    %61 = vector.broadcast %c1677722_i32 : i32 to vector<16x32xi32>
    %62 = arith.cmpi sge, %60, %61 : vector<16x32xi32>
    %cst_19 = arith.constant 1.11111116 : f32
    %63 = vector.broadcast %cst_19 : f32 to vector<16x32xf32>
    %64 = arith.mulf %30, %63 : vector<16x32xf32>
    %cst_20 = arith.constant 0.000000e+00 : f32
    %65 = vector.broadcast %cst_20 : f32 to vector<16x32xf32>
    %66 = arith.select %62, %64, %65 : vector<16x32xi1>, vector<16x32xf32>
    %c0_21 = arith.constant 0 : index
    %c0_22 = arith.constant 0 : index
    %67 = vector.load %arg4[%c0_21, %c0_22] : memref<16x32xf32, #tpu.memory_space<vmem>>, vector<16x32xf32>
    %68 = arith.addf %67, %66 : vector<16x32xf32>
    %c0_23 = arith.constant 0 : index
    %c0_24 = arith.constant 0 : index
    %69 = vector.load %arg9[%c0_23, %c0_24] : memref<16x32xf32, #tpu.memory_space<vmem>>, vector<16x32xf32>
    tpu.vector_store %arg9[%c0_23, %c0_24], %68 {strides = array<i32>} : memref<16x32xf32, #tpu.memory_space<vmem>>, vector<16x32xf32>,
    return
  }
  func.func @transform_0(%arg0: i32, %arg1: i32, %arg2: memref<1xi32, #tpu.memory_space<smem>>) -> (i32, i32) {
    %c0_i32 = arith.constant 0 : i32
    %c0_i32_0 = arith.constant 0 : i32
    return %arg0, %c0_i32 : i32, i32
  }
  func.func @transform_1(%arg0: i32, %arg1: i32, %arg2: memref<1xi32, #tpu.memory_space<smem>>) -> (i32, i32) {
    %c0_i32 = arith.constant 0 : i32
    return %arg0, %arg1 : i32, i32
  }
  func.func @transform_2(%arg0: i32, %arg1: i32, %arg2: memref<1xi32, #tpu.memory_space<smem>>) -> (i32, i32) {
    %c0_i32 = arith.constant 0 : i32
    %c0_i32_0 = arith.constant 0 : i32
    %c0_i32_1 = arith.constant 0 : i32
    return %c0_i32, %c0_i32_0 : i32, i32
  }
  func.func @transform_3(%arg0: i32, %arg1: i32, %arg2: memref<1xi32, #tpu.memory_space<smem>>) -> (i32, i32) {
    %c0_i32 = arith.constant 0 : i32
    %c0_i32_0 = arith.constant 0 : i32
    %c0_i32_1 = arith.constant 0 : i32
    return %c0_i32, %c0_i32_0 : i32, i32
  }
  func.func @transform_4(%arg0: i32, %arg1: i32, %arg2: memref<1xi32, #tpu.memory_space<smem>>) -> (i32, i32) {
    %c0_i32 = arith.constant 0 : i32
    %c0_i32_0 = arith.constant 0 : i32
    return %c0_i32, %arg1 : i32, i32
  }
  func.func @transform_5(%arg0: i32, %arg1: i32, %arg2: memref<1xi32, #tpu.memory_space<smem>>) -> (i32, i32) {
    %c0_i32 = arith.constant 0 : i32
    %c0_i32_0 = arith.constant 0 : i32
    return %c0_i32, %arg1 : i32, i32
  }
  func.func @transform_6(%arg0: i32, %arg1: i32, %arg2: memref<1xi32, #tpu.memory_space<smem>>) -> (i32, i32) {
    %c0_i32 = arith.constant 0 : i32
    return %arg0, %arg1 : i32, i32
  }
}

</mosaic_0001>

<llo_original>
// kernel: tpu_custom_call.1
$region0: #{tpu_custom_call.1}
  #allocation0 [shape = 'u32[]', space=smem, size = 0x4, offset = 0x4, fixed_abs, tag = 'smem constant byte address 0x4 - core index']
  #allocation1 [shape = 'u32[72,128]{1,0:T(1,128)}', space=vmem, size = 0x9000, scoped, tag = 'internal scratch']
  #allocation2 [shape = 's32[1]{0}', space=sflag, size = 0x4, scoped, tag = 'scoped memory for tpu_custom_call.1']
  #allocation3 [shape = 's32[1]{0:T(128)S(6)}', space=smem, size = 0x200, scoped, tag = 'prefetched SMEM operand 0']
  %s0 = inlined_call_operand.<no memory space> [shape: s32[1], index: 0, kind: input, shape index: {}]
  %s1 = inlined_call_operand.hbm [shape: f32[16,32], index: 1, kind: input, shape index: {}]
  %s2 = inlined_call_operand.hbm [shape: f32[16,32], index: 2, kind: input, shape index: {}]
  %s3 = inlined_call_operand.vmem [shape: f32[1,32], index: 3, kind: input, shape index: {}]
  %s4 = inlined_call_operand.vmem [shape: f32[1,32], index: 4, kind: input, shape index: {}]
  %s5 = inlined_call_operand.hbm [shape: bf16[32,32], index: 5, kind: input, shape index: {}]
  %s6 = inlined_call_operand.vmem [shape: f32[1,32], index: 6, kind: input, shape index: {}]
  %s7 = inlined_call_operand.hbm [shape: f32[16,32], index: 7, kind: output, shape index: {}]
  %s8 = sld [smem:[#allocation0]]
  $region46: #{tpu_custom_call.1} parent=0
    _
  %s10 = ssub.s32 1, %s8
  %s11 = scalar_select 0, %s10, %s8
  %12 = sst [smem:[#allocation3]] %s0
  $region1: #{tpu_custom_call.1} parent=0
    #allocation4 [shape = 'u8[8192]{0}', space=vmem, size = 0x2000, scoped, tag = 'input window, operand 1, single buffered']
    #allocation5 [shape = 's32[1]{0}', space=sflag, size = 0x4, scoped, tag = 'scoped memory for tpu_custom_call.1']
    #allocation6 [shape = 's32[1]{0}', space=sflag, size = 0x4, scoped, tag = 'scoped memory for tpu_custom_call.1']
    #allocation7 [shape = 'u8[8192]{0}', space=vmem, size = 0x2000, scoped, tag = 'input window, operand 2, single buffered']
    #allocation8 [shape = 's32[1]{0}', space=sflag, size = 0x4, scoped, tag = 'scoped memory for tpu_custom_call.1']
    #allocation9 [shape = 'u8[8192]{0}', space=vmem, size = 0x2000, scoped, tag = 'input window, operand 5, single buffered']
    #allocation10 [shape = 'u8[8192]{0}', space=vmem, size = 0x2000, scoped, tag = 'output window, operand 0, single buffered']
    %13 = vsyncpa [#allocation5], 0
    %14 = vsyncpa [#allocation8], 0
    %15 = vsyncpa [#allocation6], 0
    // Predicated region
    $region2: #{tpu_custom_call.1} parent=1 // pred_check
      _
    $region3: #{tpu_custom_call.1} parent=1 // pred_check_branch
      %17 = sbr.rel (0) target = $region5
    $region4: #{tpu_custom_call.1} parent=1 // pred_region
      %19 = vsyncadd [#allocation5], 0
      %s20 = sshll.u32 %s1, 4
      %s21 = int_to_ptr.hbm [resolvable:$true] %s20
      %s22 = sshll.u32 [#allocation4], 4
      %s23 = int_to_ptr.vmem [resolvable:$true] %s22
      %28 = dma.hbm_to_vmem [thread:$0]  %s21, 256, %s23, [#allocation5], 128, 128, 8
    $region5: #{tpu_custom_call.1} parent=1 // pred_fallthru
      _
    // Predicated region
    $region6: #{tpu_custom_call.1} parent=1 // pred_check
      _
    $region7: #{tpu_custom_call.1} parent=1 // pred_check_branch
      %30 = sbr.rel (0) target = $region9
    $region8: #{tpu_custom_call.1} parent=1 // pred_region
      %32 = vsyncadd [#allocation8], 0
      %s33 = sshll.u32 %s2, 4
      %s34 = int_to_ptr.hbm [resolvable:$true] %s33
      %s35 = sshll.u32 [#allocation7], 4
      %s36 = int_to_ptr.vmem [resolvable:$true] %s35
      %41 = dma.hbm_to_vmem [thread:$0]  %s34, 256, %s36, [#allocation8], 128, 128, 8
    $region9: #{tpu_custom_call.1} parent=1 // pred_fallthru
      _
    // Predicated region
    $region10: #{tpu_custom_call.1} parent=1 // pred_check
      _
    $region11: #{tpu_custom_call.1} parent=1 // pred_check_branch
      %43 = sbr.rel (0) target = $region13
    $region12: #{tpu_custom_call.1} parent=1 // pred_region
      _
    $region13: #{tpu_custom_call.1} parent=1 // pred_fallthru
      _
    // Predicated region
    $region14: #{tpu_custom_call.1} parent=1 // pred_check
      _
    $region15: #{tpu_custom_call.1} parent=1 // pred_check_branch
      %45 = sbr.rel (0) target = $region17
    $region16: #{tpu_custom_call.1} parent=1 // pred_region
      _
    $region17: #{tpu_custom_call.1} parent=1 // pred_fallthru
      _
    // Predicated region
    $region18: #{tpu_custom_call.1} parent=1 // pred_check
      _
    $region19: #{tpu_custom_call.1} parent=1 // pred_check_branch
      %47 = sbr.rel (0) target = $region21
    $region20: #{tpu_custom_call.1} parent=1 // pred_region
      %49 = vsyncadd [#allocation8], 0
      %s50 = sshll.u32 %s5, 4
      %s51 = int_to_ptr.hbm [resolvable:$true] %s50
      %s52 = sshll.u32 [#allocation9], 4
      %s53 = int_to_ptr.vmem [resolvable:$true] %s52
      %58 = dma.hbm_to_vmem [thread:$0]  %s51, 256, %s53, [#allocation8], 64, 64, 4
    $region21: #{tpu_custom_call.1} parent=1 // pred_fallthru
      _
    // Predicated region
    $region22: #{tpu_custom_call.1} parent=1 // pred_check
      _
    $region23: #{tpu_custom_call.1} parent=1 // pred_check_branch
      %60 = sbr.rel (0) target = $region25
    $region24: #{tpu_custom_call.1} parent=1 // pred_region
      _
    $region25: #{tpu_custom_call.1} parent=1 // pred_fallthru
      _
    // Predicated region
    $region26: #{tpu_custom_call.1} parent=1 // pred_check
      _
    $region27: #{tpu_custom_call.1} parent=1 // pred_check_branch
      %62 = sbr.rel (0) target = $region29
    $region28: #{tpu_custom_call.1} parent=1 // pred_region
      %64 = dma.done [#allocation5], 256
    $region29: #{tpu_custom_call.1} parent=1 // pred_fallthru
      _
    // Predicated region
    $region30: #{tpu_custom_call.1} parent=1 // pred_check
      _
    $region31: #{tpu_custom_call.1} parent=1 // pred_check_branch
      %66 = sbr.rel (0) target = $region33
    $region32: #{tpu_custom_call.1} parent=1 // pred_region
      %68 = dma.done [#allocation8], 256
    $region33: #{tpu_custom_call.1} parent=1 // pred_fallthru
      _
    // Predicated region
    $region34: #{tpu_custom_call.1} parent=1 // pred_check
      _
    $region35: #{tpu_custom_call.1} parent=1 // pred_check_branch
      %70 = sbr.rel (0) target = $region37
    $region36: #{tpu_custom_call.1} parent=1 // pred_region
      %72 = dma.done [#allocation8], 256
    $region37: #{tpu_custom_call.1} parent=1 // pred_fallthru
      _
    %v74 = vld [vmem:[#allocation4] sm:$0xff]
    %v75 = vld [vmem:[#allocation4 + $0x8] sm:$0xff]
    %vm76 = vcmask 261120
    %v77 = vsel %vm76, %v74, 0.0
    %78 = vadd.xlane.f32.xlu0 %v77
    %v79 = vpop.xlane.xlu0 %78
    %v80 = vsel %vm76, %v75, 0.0
    %81 = vadd.xlane.f32.xlu0 %v80
    %v82 = vpop.xlane.xlu0 %81
    %v83 = vrcp.pop 32.0
    %v84 = vmul.f32 32.0, %v83
    %v85 = vsub.f32 1.0, %v84
    %v86 = vmul.f32 %v83, %v85
    %v87 = vadd.f32 %v83, %v86
    %vm88 = vweird.f32 %v83
    %v89 = vsel %vm88, %v83, %v87
    %v90 = vmul.f32 %v79, %v89
    %v91 = vmul.f32 %v82, %v89
    %v92 = vsub.f32 %v74, %v90
    %v93 = vsub.f32 %v75, %v91
    %v94 = vmul.f32 %v92, %v92
    %v95 = vmul.f32 %v93, %v93
    %v96 = vsel %vm76, %v94, 0.0
    %97 = vadd.xlane.f32.xlu0 %v96
    %v98 = vpop.xlane.xlu0 %97
    %v99 = vsel %vm76, %v95, 0.0
    %100 = vadd.xlane.f32.xlu0 %v99
    %v101 = vpop.xlane.xlu0 %100
    %v102 = vrcp.pop 31.0
    %v103 = vmul.f32 31.0, %v102
    %v104 = vsub.f32 1.0, %v103
    %v105 = vmul.f32 %v102, %v104
    %v106 = vadd.f32 %v102, %v105
    %vm107 = vweird.f32 %v102
    %v108 = vsel %vm107, %v102, %v106
    %v109 = vmul.f32 %v98, %v108
    %v110 = vmul.f32 %v101, %v108
    %v111 = vrsqrt.pop %v109
    %v112 = vmul.f32 %v111, %v109
    %v113 = vmul.f32 %v112, %v111
    %v114 = vmul.f32 0.5, %v113
    %v115 = vsub.f32 1.5, %v114
    %v116 = vmul.f32 %v111, %v115
    %v117 = vmul.f32 %v109, %v116
    %vm118 = vcmp.eq.f32.partialorder %v109, inf
    %v119 = vsel %vm118, %v109, %v117
    %vm120 = vcmp.eq.f32.partialorder %v109, 0.0
    %v121 = vand.u32 %v109, 2147483648
    %v122 = vsel %vm120, %v121, %v119
    %v123 = vrsqrt.pop %v110
    %v124 = vmul.f32 %v123, %v110
    %v125 = vmul.f32 %v124, %v123
    %v126 = vmul.f32 0.5, %v125
    %v127 = vsub.f32 1.5, %v126
    %v128 = vmul.f32 %v123, %v127
    %v129 = vmul.f32 %v110, %v128
    %vm130 = vcmp.eq.f32.partialorder %v110, inf
    %v131 = vsel %vm130, %v110, %v129
    %vm132 = vcmp.eq.f32.partialorder %v110, 0.0
    %v133 = vand.u32 %v110, 2147483648
    %v134 = vsel %vm132, %v133, %v131
    %v135 = vadd.f32 %v122, 1e-06
    %v136 = vadd.f32 %v134, 1e-06
    %v137 = vrcp.pop %v135
    %v138 = vmul.f32 %v135, %v137
    %v139 = vsub.f32 1.0, %v138
    %v140 = vmul.f32 %v137, %v139
    %v141 = vadd.f32 %v137, %v140
    %vm142 = vweird.f32 %v135
    %vm143 = vweird.f32 %v137
    %vm144 = vmor %vm142, %vm143
    %v145 = vsel %vm144, %v137, %v141
    %v146 = vand.u32 2147483647, %v135
    %vm147 = vcmp.eq.f32.partialorder %v146, 8.507059e+37
    %v148 = vand.u32 %v135, 2147483648
    %v149 = vor.u32 1.1754944e-38, %v148
    %v150 = vsel %vm147, %v149, %v145
    %v151 = vmul.f32 1.0, %v150
    %v152 = vrcp.pop %v136
    %v153 = vmul.f32 %v136, %v152
    %v154 = vsub.f32 1.0, %v153
    %v155 = vmul.f32 %v152, %v154
    %v156 = vadd.f32 %v152, %v155
    %vm157 = vweird.f32 %v136
    %vm158 = vweird.f32 %v152
    %vm159 = vmor %vm157, %vm158
    %v160 = vsel %vm159, %v152, %v156
    %v161 = vand.u32 2147483647, %v136
    %vm162 = vcmp.eq.f32.partialorder %v161, 8.507059e+37
    %v163 = vand.u32 %v136, 2147483648
    %v164 = vor.u32 1.1754944e-38, %v163
    %v165 = vsel %vm162, %v164, %v160
    %v166 = vmul.f32 1.0, %v165
    %v167 = vld [vmem:[%s3] sm:$0x1]
    %v168 = vmul.f32 %v92, %v151
    %v169 = vmul.f32 %v93, %v166
    %v171 = vperm.slane %v167, 0
    %v173 = vmul.f32 %v171, %v168
    %v174 = vmul.f32 %v171, %v169
    %v175 = vld [vmem:[%s4] sm:$0x1]
    %v177 = vperm.slane %v175, 0
    %v179 = vadd.f32 %v173, %v177
    %v180 = vadd.f32 %v174, %v177
    %v181 = vpack.c.bf16 %v180, %v179
    %v182 = vld [vmem:[#allocation9] sm:$0xf]
    %v183 = vld [vmem:[#allocation9 + $0x4] sm:$0xf]
    %v184 = vld [vmem:[#allocation9 + $0x8] sm:$0xf]
    %v185 = vld [vmem:[#allocation9 + $0xc] sm:$0xf]
    %v186 = vld [vmem:[%s6] sm:$0x1]
    %v188 = vperm.slane %v186, 0
    %v194 = vunpack.c.l.b16 %v182
    %v195 = vunpack.c.l.b16 %v183
    %v196 = vunpack.c.l.b16 %v184
    %v197 = vunpack.c.l.b16 %v185
    %v198 = vpack.c.b16 %v195, %v194
    %v199 = vpack.c.b16 %v197, %v196
    %v203 = vsel %vm76, %v181, 0
    %205 = vmatpush.bf16.msra.mxu0 0
    %206 = vmatpush.bf16.msra.mxu0 0
    %207 = vmatpush.bf16.msra.mxu0 0
    %208 = vmatpush.bf16.msra.mxu0 0
    %209 = vmatpush.bf16.msra.mxu0 0
    %210 = vmatpush.bf16.msra.mxu0 0
    %211 = vmatpush.bf16.msra.mxu0 %v199
    %212 = vmatpush.bf16.msra.mxu0 %v198
    %213 = vmatmul.bf16.gmra.mxu0 %v203
    %v214 = vpop.f32.mrf.mxu0
    %v215 = vadd.f32 %v188, %v214
    %v216 = vpop.f32.mrf.mxu0
    %v217 = vadd.f32 %v188, %v216
    %218 = vdwg.mxu0
    %s219 = smul.u32 0, 16
    %s220 = smul.u32 0, 32
    %v221 = vlaneseq
    %v222 = vshrl.u32 %v221, 7
    %v223 = vadd.s32 %v222, 8
    %v224 = vstv %s219
    %v225 = vadd.s32 %v222, %v224
    %v226 = vadd.s32 %v223, %v224
    %v227 = vlaneseq
    %v228 = vand.u32 %v227, 127
    %v229 = vstv %s220
    %v230 = vadd.s32 %v228, %v229
    %v231 = vmul.u32 %v225, 32
    %v232 = vmul.u32 %v226, 32
    %v233 = vadd.s32 %v231, %v230
    %v234 = vadd.s32 %v232, %v230
    %s235 = sld [smem:[#allocation3]]
    %s236 = smul.u32 %s235, 2654435769
    %v237 = vstv %s236
    %v238 = vxor.u32 %v233, %v237
    %v239 = vxor.u32 %v234, %v237
    %v240 = vshrl.u32 %v238, 16
    %v241 = vshrl.u32 %v239, 16
    %v242 = vxor.u32 %v238, %v240
    %v243 = vxor.u32 %v239, %v241
    %v244 = vmul.u32 %v242, 2146121005
    %v245 = vmul.u32 %v243, 2146121005
    %v246 = vshrl.u32 %v244, 15
    %v247 = vshrl.u32 %v245, 15
    %v248 = vxor.u32 %v244, %v246
    %v249 = vxor.u32 %v245, %v247
    %v250 = vmul.u32 %v248, 2221713035
    %v251 = vmul.u32 %v249, 2221713035
    %v252 = vshrl.u32 %v250, 16
    %v253 = vshrl.u32 %v251, 16
    %v254 = vxor.u32 %v250, %v252
    %v255 = vxor.u32 %v251, %v253
    %v256 = vshrl.u32 %v254, 8
    %v257 = vshrl.u32 %v255, 8
    %vm258 = vcmp.ge.s32.totalorder %v256, 1677722
    %vm259 = vcmp.ge.s32.totalorder %v257, 1677722
    %v260 = vmul.f32 %v215, 1.1111112
    %v261 = vmul.f32 %v217, 1.1111112
    %v262 = vsel %vm258, %v260, 0.0
    %v263 = vsel %vm259, %v261, 0.0
    %v264 = vld [vmem:[#allocation7] sm:$0xff]
    %v265 = vld [vmem:[#allocation7 + $0x8] sm:$0xff]
    %v266 = vadd.f32 %v264, %v262
    %v267 = vadd.f32 %v265, %v263
    %268 = vst.msk [vmem:[#allocation10] sm:$0xff] %vm76, %v266
    %269 = vst.msk [vmem:[#allocation10 + $0x8] sm:$0xff] %vm76, %v267
    // Predicated region
    $region38: #{tpu_custom_call.1} parent=1 // pred_check
      _
    $region39: #{tpu_custom_call.1} parent=1 // pred_check_branch
      %271 = sbr.rel (0) target = $region41
    $region40: #{tpu_custom_call.1} parent=1 // pred_region
      %273 = vsyncadd [#allocation6], 0
      %s274 = sshll.u32 [#allocation10], 4
      %s275 = int_to_ptr.vmem [resolvable:$true] %s274
      %s276 = sshll.u32 %s7, 4
      %s277 = int_to_ptr.hbm [resolvable:$true] %s276
      %282 = dma.vmem_to_hbm [thread:$0]  %s275, 256, %s277, [#allocation6], 128, 128, 8
    $region41: #{tpu_custom_call.1} parent=1 // pred_fallthru
      _
    // Predicated region
    $region42: #{tpu_custom_call.1} parent=1 // pred_check
      _
    $region43: #{tpu_custom_call.1} parent=1 // pred_check_branch
      %284 = sbr.rel (0) target = $region45
    $region44: #{tpu_custom_call.1} parent=1 // pred_region
      %286 = dma.done [#allocation6], 256
    $region45: #{tpu_custom_call.1} parent=1 // pred_fallthru
      _
    %287 = vsyncpa [#allocation5], 1
    %288 = vsyncpa [#allocation8], 1
    %289 = vsyncpa [#allocation6], 1

</llo_original>
